<compile_context>
chip_gen: v5e
topology: v5e:2x2
jax: 0.10.0
libtpu: 0.0.40
codegen_flags: <defaults>
</compile_context>

<pallas_src>
import functools

import jax
import jax.numpy as jnp
from jax.experimental import pallas as pl
from jax.experimental.pallas import tpu as pltpu


_CHUNK_C_THRESHOLD = 4096   # switch to chunked-C online softmax above this
_CHUNK_COLS = 2048          # C-chunk width for the chunked path (multiple of 128)


def _vmem_capacity_bytes():
    """Physical VMEM per core; conservative fallback if the query fails."""
    try:
        info = pltpu.get_tpu_info()
        cap = getattr(info, "vmem_capacity_bytes", None)
        if cap:
            return int(cap)
    except Exception:
        pass
    return 64 * 1024 * 1024  # v7x floor


def _ce_partial_kernel(logits_ref, class_ref, partial_ref, *,
                       total_rows, block_rows, chunk_cols):
    """Per-tile partial sum of cross-entropy row losses.

    logits_ref : (TB, C)  native dtype, VMEM
    class_ref  : (TB, 1)  int32, VMEM
    partial_ref: (1, 1)   float32, SMEM -- this tile's sum of (lse - target)
    """
    pid = pl.program_id(0)
    tb, c = logits_ref.shape
    cls = class_ref[...]                                           # (TB, 1) int32

    if chunk_cols is None or chunk_cols >= c:
        # ---------------- whole-row path (classification-head sized C) -------
        logits = logits_ref[...]                                   # native dtype
        # Max is exact in bf16; only the (TB,1) result is promoted to f32.
        row_max = jnp.max(logits, axis=-1, keepdims=True).astype(jnp.float32)
        shifted = logits.astype(jnp.float32) - row_max             # (TB, C) f32
        sum_exp = jnp.sum(jnp.exp(shifted), axis=-1, keepdims=True)
        lse = row_max + jnp.log(sum_exp)                           # (TB, 1) f32

        # Target logit: compare/select on the RAW native logits (bf16 VALU
        # path), broadcast (1, C) iota.  Exactly one non-zero addend per row,
        # so the native-dtype sum is exact.
        col_ids = jax.lax.broadcasted_iota(jnp.int32, (1, c), 1)   # (1, C)
        tgt = jnp.sum(
            jnp.where(col_ids == cls, logits, jnp.zeros((), logits.dtype)),
            axis=-1, keepdims=True,
        ).astype(jnp.float32)                                      # (TB, 1)

        per_row = lse - tgt                                        # (TB, 1)
    else:
        # ---------------- chunked-C online-softmax path (large vocab) --------
        cb = chunk_cols
        nfull = c // cb
        rem = c - nfull * cb

        m0 = jnp.full((tb, 1), -jnp.inf, jnp.float32)
        s0 = jnp.zeros((tb, 1), jnp.float32)
        t0 = jnp.zeros((tb, 1), jnp.float32)

        def accum(c0, cw, carry):
            m, s, t = carry
            chunk_native = logits_ref[:, pl.ds(c0, cw)]            # (TB, cw)
            chunk = chunk_native.astype(jnp.float32)
            cmax = jnp.max(chunk, axis=-1, keepdims=True)
            m_new = jnp.maximum(m, cmax)
            s = s * jnp.exp(m - m_new) + jnp.sum(
                jnp.exp(chunk - m_new), axis=-1, keepdims=True)
            col_ids = c0 + jax.lax.broadcasted_iota(jnp.int32, (1, cw), 1)
            t = t + jnp.sum(
                jnp.where(col_ids == cls, chunk_native,
                          jnp.zeros((), chunk_native.dtype)),
                axis=-1, keepdims=True,
            ).astype(jnp.float32)
            return m_new, s, t

        def body(j, carry):
            c0 = pl.multiple_of(j * cb, cb)
            return accum(c0, cb, carry)

        m, s, t = jax.lax.fori_loop(0, nfull, body, (m0, s0, t0))
        if rem:
            m, s, t = accum(nfull * cb, rem, (m, s, t))
        per_row = m + jnp.log(s) - t                               # (TB, 1)

    # Mask rows past the true batch size (ragged last tile / padded rows);
    # garbage (even NaN) in padded rows cannot poison the partial sum.
    row_ids = pid * block_rows + jax.lax.broadcasted_iota(jnp.int32, (tb, 1), 0)
    valid = row_ids < total_rows
    partial_ref[0, 0] = jnp.sum(jnp.where(valid, per_row, 0.0))


def ordinary_criterion(net_out, batch):
    """JAX/Pallas equivalent of OrdinaryCriterion.forward (mean CE loss)."""
    logits = net_out["logits"]                 # (B, C), kept in native dtype
    class_id = batch["class_id"]               # (B, 1) int
    B, C = logits.shape
    class_id = class_id.astype(jnp.int32).reshape(B, 1)

    itemsize = jnp.dtype(logits.dtype).itemsize
    capacity = _vmem_capacity_bytes()

    # Working VMEM budget for one grid step, counting double-buffered inputs
    # plus the per-tile f32 / mask intermediates (not inputs alone).
    if capacity <= 64 * 1024 * 1024:           # v7x-class core (64 MiB physical)
        budget = 28 * 1024 * 1024
    else:                                      # v5e / v6e (128 MiB physical)
        budget = 48 * 1024 * 1024

    use_chunked = C > _CHUNK_C_THRESHOLD
    if use_chunked:
        chunk_cols = _CHUNK_COLS
        # resident input (double-buffered) + bounded f32/select chunk temps
        row_bytes = 2 * C * itemsize + chunk_cols * (itemsize + 16)
    else:
        chunk_cols = None
        # 2*itemsize (double-buffered input) + ~itemsize (select out)
        # + ~12 B (f32 shifted, f32 exp, compare mask) per element
        row_bytes = C * (3 * itemsize + 12)

    TB = max(8, min(2048, (budget // row_bytes) // 8 * 8))
    # Keep at least 2 tiles whenever possible so the "parallel" grid axis can
    # shard across both v7x TensorCores (one extra grid step elsewhere is
    # negligible for a mem-bound kernel).
    if B > 8:
        TB = min(TB, pl.cdiv(pl.cdiv(B, 2), 8) * 8)
    TB = min(TB, pl.cdiv(B, 8) * 8)
    TB = max(TB, 8)
    num_tiles = pl.cdiv(B, TB)

    # Explicit scoped-VMEM limit: generously above our estimated footprint but
    # well inside physical VMEM for every generation.
    est_bytes = TB * row_bytes + (1 << 20)
    vmem_limit = int(min(3 * capacity // 4, max(2 * est_bytes, 32 * 1024 * 1024)))

    kernel = functools.partial(
        _ce_partial_kernel, total_rows=B, block_rows=TB, chunk_cols=chunk_cols)

    partials = pl.pallas_call(
        kernel,
        out_shape=jax.ShapeDtypeStruct((num_tiles, 1), jnp.float32),
        grid=(num_tiles,),
        in_specs=[
            pl.BlockSpec((TB, C), lambda i: (i, 0)),
            pl.BlockSpec((TB, 1), lambda i: (i, 0)),
        ],
        # One scalar partial per tile in SMEM; the tiny final mean is done in
        # the wrapper so the grid axis can stay "parallel".
        out_specs=pl.BlockSpec((1, 1), lambda i: (i, 0), memory_space=pltpu.SMEM),
        compiler_params=pltpu.CompilerParams(
            dimension_semantics=("parallel",),
            vmem_limit_bytes=vmem_limit,
        ),
        cost_estimate=pl.CostEstimate(
            flops=5 * B * C,
            transcendentals=B * C + B,
            bytes_accessed=B * C * itemsize + 4 * B + 4 * num_tiles,
        ),
    )(logits, class_id)

    loss = jnp.sum(partials) / jnp.float32(B)
    return {"loss": loss}


def _reference_loss(logits, class_id):
    log_probs = jax.nn.log_softmax(logits.astype(jnp.float32), axis=-1)
    b = logits.shape[0]
    return -jnp.mean(log_probs[jnp.arange(b), class_id[:, 0]])


if __name__ == "__main__":
    key = jax.random.PRNGKey(0)

    # Case 1: single tile (B=8, C=32).
    k1, k2, k3, k4 = jax.random.split(key, 4)
    B1, C1 = 8, 32
    logits1 = jax.random.normal(k1, (B1, C1), dtype=jnp.float32)
    cls1 = jax.random.randint(k2, (B1, 1), 0, C1, dtype=jnp.int32)
    out1 = ordinary_criterion({"logits": logits1}, {"class_id": cls1})
    loss1 = jax.block_until_ready(out1["loss"])
    ref1 = _reference_loss(logits1, cls1)
    assert jnp.allclose(loss1, ref1, atol=1e-5, rtol=1e-5), (loss1, ref1)

    # Case 2: multiple tiles with a ragged last tile (B=20 -> 2 tiles of 16).
    B2, C2 = 20, 48
    logits2 = jax.random.normal(k3, (B2, C2), dtype=jnp.float32)
    cls2 = jax.random.randint(k4, (B2, 1), 0, C2, dtype=jnp.int32)
    out2 = ordinary_criterion({"logits": logits2}, {"class_id": cls2})
    loss2 = jax.block_until_ready(out2["loss"])
    ref2 = _reference_loss(logits2, cls2)
    assert jnp.allclose(loss2, ref2, atol=1e-5, rtol=1e-5), (loss2, ref2)

    print("KERNEL_OK")
</pallas_src>

<mosaic_0001>
module attributes {stable_mosaic.version = 11 : i64} {
  func.func @_ce_partial_kernel(%arg0: i32, %arg1: memref<8x32xf32, #tpu.memory_space<vmem>>, %arg2: memref<8x1xi32, #tpu.memory_space<vmem>>, %arg3: memref<1x1xf32, #tpu.memory_space<smem>>) attributes {dimension_semantics = [#tpu.dimension_semantics<parallel>], iteration_bounds = array<i64: 1>, scalar_prefetch = 0 : i64, scratch_operands = 0 : i64, tpu.core_type = #tpu.core_type<tc>, window_params = [{transform_indices = @transform_0, window_bounds = array<i64: 8, 32>}, {transform_indices = @transform_1, window_bounds = array<i64: 8, 1>}, {transform_indices = @transform_2, window_bounds = array<i64: 1, 1>}]} {
    %c0 = arith.constant 0 : index
    %c0_0 = arith.constant 0 : index
    %0 = vector.load %arg2[%c0, %c0_0] : memref<8x1xi32, #tpu.memory_space<vmem>>, vector<8x1xi32>
    %c0_1 = arith.constant 0 : index
    %c0_2 = arith.constant 0 : index
    %1 = vector.load %arg1[%c0_1, %c0_2] : memref<8x32xf32, #tpu.memory_space<vmem>>, vector<8x32xf32>
    %cst = arith.constant dense<0xFF800000> : vector<8xf32>
    %2 = vector.multi_reduction <maximumf>, %1, %cst [1] : vector<8x32xf32> to vector<8xf32>
    %3 = vector.shape_cast %2 : vector<8xf32> to vector<8x1xf32>
    %4 = vector.broadcast %3 : vector<8x1xf32> to vector<8x32xf32>
    %5 = arith.subf %1, %4 : vector<8x32xf32>
    %6 = math.exp %5 : vector<8x32xf32>
    %cst_3 = arith.constant dense<0.000000e+00> : vector<8xf32>
    %7 = vector.multi_reduction <add>, %6, %cst_3 [1] : vector<8x32xf32> to vector<8xf32>
    %8 = vector.shape_cast %7 : vector<8xf32> to vector<8x1xf32>
    %9 = math.log %8 : vector<8x1xf32>
    %10 = arith.addf %3, %9 : vector<8x1xf32>
    %11 = tpu.iota {dimensions = array<i32: 1>} : vector<1x32xi32>
    %12 = vector.broadcast %11 : vector<1x32xi32> to vector<8x32xi32>
    %13 = vector.broadcast %0 : vector<8x1xi32> to vector<8x32xi32>
    %14 = arith.cmpi eq, %12, %13 : vector<8x32xi32>
    %cst_4 = arith.constant 0.000000e+00 : f32
    %15 = vector.broadcast %cst_4 : f32 to vector<8x32xf32>
    %16 = arith.select %14, %1, %15 : vector<8x32xi1>, vector<8x32xf32>
    %cst_5 = arith.constant dense<0.000000e+00> : vector<8xf32>
    %17 = vector.multi_reduction <add>, %16, %cst_5 [1] : vector<8x32xf32> to vector<8xf32>
    %18 = vector.shape_cast %17 : vector<8xf32> to vector<8x1xf32>
    %19 = arith.subf %10, %18 : vector<8x1xf32>
    %c8_i32 = arith.constant 8 : i32
    %20 = arith.muli %arg0, %c8_i32 : i32
    %21 = tpu.iota {dimensions = array<i32: 0>} : vector<8x1xi32>
    %22 = vector.broadcast %20 : i32 to vector<8x1xi32>
    %23 = arith.addi %22, %21 : vector<8x1xi32>
    %c8_i32_6 = arith.constant 8 : i32
    %24 = vector.broadcast %c8_i32_6 : i32 to vector<8x1xi32>
    %25 = arith.cmpi slt, %23, %24 : vector<8x1xi32>
    %cst_7 = arith.constant 0.000000e+00 : f32
    %26 = vector.broadcast %cst_7 : f32 to vector<8x1xf32>
    %27 = arith.select %25, %19, %26 : vector<8x1xi1>, vector<8x1xf32>
    %28 = vector.shape_cast %27 : vector<8x1xf32> to vector<1x8x1xf32>
    %cst_8 = arith.constant dense<0.000000e+00> : vector<1xf32>
    %29 = vector.multi_reduction <add>, %28, %cst_8 [1, 2] : vector<1x8x1xf32> to vector<1xf32>
    %30 = vector.shape_cast %29 : vector<1xf32> to vector<1x1x1xf32>
    %31 = vector.extract %30[0, 0, 0] : f32 from vector<1x1x1xf32>
    %c0_9 = arith.constant 0 : index
    %c0_10 = arith.constant 0 : index
    %32 = memref.load %arg3[%c0_9, %c0_10] : memref<1x1xf32, #tpu.memory_space<smem>>
    memref.store %31, %arg3[%c0_9, %c0_10] : memref<1x1xf32, #tpu.memory_space<smem>>
    return
  }
  func.func @transform_0(%arg0: i32) -> (i32, i32) {
    %c0_i32 = arith.constant 0 : i32
    %c0_i32_0 = arith.constant 0 : i32
    return %arg0, %c0_i32 : i32, i32
  }
  func.func @transform_1(%arg0: i32) -> (i32, i32) {
    %c0_i32 = arith.constant 0 : i32
    %c0_i32_0 = arith.constant 0 : i32
    return %arg0, %c0_i32 : i32, i32
  }
  func.func @transform_2(%arg0: i32) -> (i32, i32) {
    %c0_i32 = arith.constant 0 : i32
    %c0_i32_0 = arith.constant 0 : i32
    return %arg0, %c0_i32 : i32, i32
  }
}

</mosaic_0001>

<llo_original>
// kernel: tpu_custom_call.1
$region0: #{tpu_custom_call.1}
  #allocation0 [shape = 'u32[]', space=smem, size = 0x4, offset = 0x4, fixed_abs, tag = 'smem constant byte address 0x4 - core index']
  #allocation1 [shape = 'u32[72,128]{1,0:T(1,128)}', space=vmem, size = 0x9000, scoped, tag = 'internal scratch']
  %s0 = inlined_call_operand.vmem [shape: f32[8,32], index: 0, kind: input, shape index: {}]
  %s1 = inlined_call_operand.vmem [shape: s32[8,1], index: 1, kind: input, shape index: {}]
  %s2 = inlined_call_operand.hbm [shape: f32[1,1], index: 2, kind: output, shape index: {}]
  %s3 = sld [smem:[#allocation0]]
  $region18: #{tpu_custom_call.1} parent=0
    _
  %s5 = ssub.s32 1, %s3
  %s6 = scalar_select 0, %s5, %s3
  $region1: #{tpu_custom_call.1} parent=0
    #allocation2 [shape = 'u8[512]{0}', space=smem, size = 0x200, scoped, tag = 'output window, operand 0, single buffered']
    #allocation3 [shape = 's32[1]{0}', space=sflag, size = 0x4, scoped, tag = 'scoped memory for tpu_custom_call.1']
    %7 = vsyncpa [#allocation3], 0
    // Predicated region
    $region2: #{tpu_custom_call.1} parent=1 // pred_check
      _
    $region3: #{tpu_custom_call.1} parent=1 // pred_check_branch
      %9 = sbr.rel (0) target = $region5
    $region4: #{tpu_custom_call.1} parent=1 // pred_region
      _
    $region5: #{tpu_custom_call.1} parent=1 // pred_fallthru
      _
    // Predicated region
    $region6: #{tpu_custom_call.1} parent=1 // pred_check
      _
    $region7: #{tpu_custom_call.1} parent=1 // pred_check_branch
      %11 = sbr.rel (0) target = $region9
    $region8: #{tpu_custom_call.1} parent=1 // pred_region
      _
    $region9: #{tpu_custom_call.1} parent=1 // pred_fallthru
      _
    %v12 = vld [vmem:[%s1] sm:$0xff]
    %v13 = vld [vmem:[%s0] sm:$0xff]
    %vm14 = vcmask 261120
    %v15 = vsel %vm14, %v13, -inf
    %16 = vmax.xlane.f32.xlu0 %v15
    %v17 = vpop.xlane.xlu0 %16
    %v18 = vsub.f32 %v13, %v17
    %v19 = vmul.f32 %v18, 1.442695
    %v20 = vpow.pop %v19
    %v21 = vsel %vm14, %v20, 0.0
    %22 = vadd.xlane.f32.xlu0 %v21
    %v23 = vpop.xlane.xlu0 %22
    %v24 = vlog2.pop %v23
    %v25 = vmul.f32 %v24, 0.6931472
    %v26 = vadd.f32 %v17, %v25
    %v27 = vlaneseq
    %v28 = vand.u32 %v27, 127
    %29 = vset.pattern.permute.xlu0 0
    %30 = vperm.xlu0 %29, %v12
    %v31 = vpop.permute.xlu0 %30
    %vm32 = vcmp.eq.s32.totalorder %v28, %v31
    %v33 = vsel %vm32, %v13, 0.0
    %v34 = vsel %vm14, %v33, 0.0
    %35 = vadd.xlane.f32.xlu0 %v34
    %v36 = vpop.xlane.xlu0 %35
    %v37 = vsub.f32 %v26, %v36
    %s38 = smul.u32 0, 8
    %v39 = vlaneseq
    %v40 = vshrl.u32 %v39, 7
    %v41 = vstv %s38
    %v42 = vadd.s32 %v41, %v40
    %vm43 = vcmp.lt.s32.totalorder %v42, 8
    %v44 = vsel %vm43, %v37, 0.0
    %vm45 = vcmask 7168
    %v46 = vsel %vm45, %v44, 0.0
    %47 = vadd.xlane.f32.xlu0 %v46
    %v48 = vpop.xlane.xlu0 %47
    %v49 = vrot.slane %v48, 4
    %v50 = vadd.f32 %v48, %v49
    %v51 = vrot.slane %v50, 2
    %v52 = vadd.f32 %v50, %v51
    %v53 = vrot.slane %v52, 1
    %v54 = vadd.f32 %v52, %v53
    %s55 = vtos %v54
    %s56 = scalar_lea.smem [#allocation2], 0
    %57 = sst [smem:[%s56]] %s55
    // Predicated region
    $region10: #{tpu_custom_call.1} parent=1 // pred_check
      _
    $region11: #{tpu_custom_call.1} parent=1 // pred_check_branch
      %59 = sbr.rel (0) target = $region13
    $region12: #{tpu_custom_call.1} parent=1 // pred_region
      %61 = vsyncadd [#allocation3], 0
      %s63 = sshll.u32 %s2, 4
      %s64 = int_to_ptr.hbm [resolvable:$true] %s63
      %66 = dma.smem_to_hbm [#allocation2], 16, %s64, [#allocation3]
    $region13: #{tpu_custom_call.1} parent=1 // pred_fallthru
      _
    // Predicated region
    $region14: #{tpu_custom_call.1} parent=1 // pred_check
      _
    $region15: #{tpu_custom_call.1} parent=1 // pred_check_branch
      %68 = sbr.rel (0) target = $region17
    $region16: #{tpu_custom_call.1} parent=1 // pred_region
      %70 = dma.done [#allocation3], 16
    $region17: #{tpu_custom_call.1} parent=1 // pred_fallthru
      _
    %71 = sfence
    %72 = vsyncpa [#allocation3], 1

</llo_original>
